<compile_context>
chip_gen: v7x
topology: tpu7x:2x2x1
jax: 0.10.0
libtpu: 0.0.40
codegen_flags: <defaults>
</compile_context>

<pallas_src>
import math

import jax
import jax.numpy as jnp
from jax.experimental import pallas as pl
from jax.experimental.pallas import tpu as pltpu


_INV_SQRT2 = 0.7071067811865476


def _erf_poly(z):
    """erf(z) via Abramowitz & Stegun 7.1.26 (max abs error ~1.5e-7).

    Uses only ops guaranteed to lower in Mosaic (abs / exp / mul / add / where).
    Not bit-identical to PyTorch's exact erf, but well within fp32/bf16 noise.
    """
    a1 = 0.254829592
    a2 = -0.284496736
    a3 = 1.421413741
    a4 = -1.453152027
    a5 = 1.061405429
    p = 0.3275911
    az = jnp.abs(z)
    t = 1.0 / (1.0 + p * az)
    poly = t * (a1 + t * (a2 + t * (a3 + t * (a4 + t * a5))))
    y = 1.0 - poly * jnp.exp(-az * az)
    return jnp.where(z < 0, -y, y)


def _gelu_exact(h):
    # Matches PyTorch nn.GELU() default (exact / erf-based) GELU.
    return 0.5 * h * (1.0 + _erf_poly(h * _INV_SQRT2))


def _tcr_kernel(te_ref, x_ref, res_ref, ws_ref, wh_ref, bs1_ref, bh_ref, o_ref):
    # te_ref:  (tm_te, T)  -- tm_te == tm (per-row path) or 1 (per-batch path)
    # x_ref / res_ref / o_ref: (tm, D)
    # ws_ref / wh_ref: (T, D) f32 (resident);  bs1_ref / bh_ref: (1, D) f32
    # bs1 already contains the folded '+1'.
    g = _gelu_exact(te_ref[...].astype(jnp.float32))
    scale_p1 = jnp.dot(g, ws_ref[...], preferred_element_type=jnp.float32) + bs1_ref[...]
    shift = jnp.dot(g, wh_ref[...], preferred_element_type=jnp.float32) + bh_ref[...]

    xv = x_ref[...].astype(jnp.float32)
    rv = res_ref[...].astype(jnp.float32)
    # TODO(synk): for bf16 x/residual on v6e/v7x the combine could stay in packed
    # bf16 (halves VPU ops); kept in f32 which is correct on all generations and
    # hidden under the HBM roofline.
    o_ref[...] = (xv * scale_p1 + shift + rv).astype(o_ref.dtype)


def _vmem_limit_bytes():
    # Generation-aware scoped-VMEM limit: ~3/4 of physical VMEM per core,
    # conservative 64 MiB fallback (v7x physical) if the query is unavailable.
    try:
        cap = int(pltpu.get_tpu_info().vmem_capacity_bytes)
    except Exception:
        cap = 64 * 1024 * 1024
    limit = min(cap * 3 // 4, 100 * 1024 * 1024)
    return int(max(limit, 32 * 1024 * 1024))


def _auto_tile_rows(rows, d_out, t_dim, itemsize, budget_bytes):
    # Streamed per row (double-buffered by the pipeline): te + x + residual + out.
    per_row_stream = (t_dim + 3 * d_out) * itemsize
    # f32 working set per row (upcasts + scale/shift/out temporaries).
    per_row_work = (t_dim + 6 * d_out) * 4
    per_row = 2 * per_row_stream + per_row_work
    tm = budget_bytes // max(per_row, 1)
    tm = max(8, min(int(tm), 4096))
    tm = (tm // 8) * 8
    if rows <= tm:
        return rows           # one full-extent block is always a legal block shape
    return tm                 # multiple of 8; Pallas masks the partial last tile


def time_conditioned_residual(x, residual, time_emb, w, b, *, tile_rows=None):
    """out = x * (scale + 1) + shift + residual,
       [scale | shift] = GELU(time_emb) @ w + b.

    w: (time_emb_dim, 2*dim_out) (= PyTorch linear.weight.T), b: (2*dim_out,).
    x, residual: (..., dim_out).
    time_emb: either x.shape[:-1] + (T,) (per-token), or -- the common module
    usage -- per-batch (B, T) / (B, 1, T) with x of shape (B, S, dim_out).
    """
    orig_shape = x.shape
    d_out = orig_shape[-1]
    t_dim = time_emb.shape[-1]
    assert residual.shape == orig_shape
    assert w.shape == (t_dim, 2 * d_out)
    assert b.shape == (2 * d_out,)

    # Resident parameters: split once at the lane-aligned half, upcast to f32
    # once, fold '+1' into the scale bias.
    # TODO(synk): when d_out % 128 == 0 a single fused (T, 2D) dot with an
    # in-kernel lane-aligned slice would save one MXU weight push; the split
    # form is kept because it is always legal and the matmul is tiny.
    w_scale = w[:, :d_out].astype(jnp.float32)
    w_shift = w[:, d_out:].astype(jnp.float32)
    b_scale1 = (b[:d_out].astype(jnp.float32) + 1.0).reshape(1, d_out)
    b_shift = b[d_out:].astype(jnp.float32).reshape(1, d_out)

    itemsize = jnp.dtype(x.dtype).itemsize
    vmem_limit = _vmem_limit_bytes()
    param_bytes = 2 * (2 * t_dim * d_out + 2 * d_out) * 4   # double-buffered f32 params
    budget = max(vmem_limit - param_bytes - 6 * 1024 * 1024, 2 * 1024 * 1024)

    per_row_path = time_emb.shape[:-1] == orig_shape[:-1]
    per_batch_path = (
        not per_row_path
        and x.ndim == 3
        and time_emb.shape in ((x.shape[0], t_dim), (x.shape[0], 1, t_dim))
    )
    if not (per_row_path or per_batch_path):
        raise ValueError(
            f"time_emb shape {time_emb.shape} is not per-token nor per-batch "
            f"broadcastable against x shape {x.shape}")

    param_ops = (w_scale, w_shift, b_scale1, b_shift)
    param_read_bytes = (2 * t_dim * d_out + 2 * d_out) * 4

    if per_row_path:
        rows = math.prod(orig_shape[:-1])
        x2d = x.reshape(rows, d_out)
        r2d = residual.reshape(rows, d_out)
        te2d = time_emb.reshape(rows, t_dim)

        if tile_rows is None:
            tm = _auto_tile_rows(rows, d_out, t_dim, itemsize, budget)
        else:
            tm = min(int(tile_rows), rows)
            if tm < rows:
                tm = max(8, (tm // 8) * 8)

        grid = (pl.cdiv(rows, tm),)
        cost = pl.CostEstimate(
            flops=2 * rows * t_dim * 2 * d_out + 6 * rows * d_out,
            transcendentals=rows * t_dim,
            bytes_accessed=rows * (t_dim + 3 * d_out) * itemsize + param_read_bytes,
        )

        out2d = pl.pallas_call(
            _tcr_kernel,
            out_shape=jax.ShapeDtypeStruct((rows, d_out), x.dtype),
            grid_spec=pltpu.PrefetchScalarGridSpec(
                num_scalar_prefetch=0,
                grid=grid,
                in_specs=[
                    pl.BlockSpec((tm, t_dim), lambda i: (i, 0)),     # time_emb rows
                    pl.BlockSpec((tm, d_out), lambda i: (i, 0)),     # x rows
                    pl.BlockSpec((tm, d_out), lambda i: (i, 0)),     # residual rows
                    pl.BlockSpec((t_dim, d_out), lambda i: (0, 0)),  # w_scale (resident)
                    pl.BlockSpec((t_dim, d_out), lambda i: (0, 0)),  # w_shift (resident)
                    pl.BlockSpec((1, d_out), lambda i: (0, 0)),      # b_scale + 1
                    pl.BlockSpec((1, d_out), lambda i: (0, 0)),      # b_shift
                ],
                out_specs=pl.BlockSpec((tm, d_out), lambda i: (i, 0)),
            ),
            compiler_params=pltpu.CompilerParams(
                dimension_semantics=("parallel",),
                vmem_limit_bytes=vmem_limit,
            ),
            cost_estimate=cost,
        )(te2d, x2d, r2d, *param_ops)
        return out2d.reshape(orig_shape)

    # --- per-batch broadcast path: x (B, S, D), time_emb (B, T) / (B, 1, T) ---
    bsz, seq, _ = x.shape
    te2d = time_emb.reshape(bsz, t_dim)

    if tile_rows is None:
        ts = _auto_tile_rows(seq, d_out, 0, itemsize, budget)
    else:
        ts = min(int(tile_rows), seq)
        if ts < seq:
            ts = max(8, (ts // 8) * 8)

    n_s = pl.cdiv(seq, ts)
    grid = (bsz, n_s)
    cost = pl.CostEstimate(
        flops=2 * bsz * n_s * t_dim * 2 * d_out + 6 * bsz * seq * d_out,
        transcendentals=bsz * n_s * t_dim,
        bytes_accessed=(bsz * t_dim + 3 * bsz * seq * d_out) * itemsize + param_read_bytes,
    )

    out = pl.pallas_call(
        _tcr_kernel,
        out_shape=jax.ShapeDtypeStruct((bsz, seq, d_out), x.dtype),
        grid_spec=pltpu.PrefetchScalarGridSpec(
            num_scalar_prefetch=0,
            grid=grid,
            in_specs=[
                # time row: constant block index over the seq axis -> DMA'd once
                # per batch element, GELU+dot recomputed per step (negligible).
                pl.BlockSpec((1, t_dim), lambda bi, si: (bi, 0)),
                pl.BlockSpec((None, ts, d_out), lambda bi, si: (bi, si, 0)),   # x
                pl.BlockSpec((None, ts, d_out), lambda bi, si: (bi, si, 0)),   # residual
                pl.BlockSpec((t_dim, d_out), lambda bi, si: (0, 0)),           # w_scale
                pl.BlockSpec((t_dim, d_out), lambda bi, si: (0, 0)),           # w_shift
                pl.BlockSpec((1, d_out), lambda bi, si: (0, 0)),               # b_scale + 1
                pl.BlockSpec((1, d_out), lambda bi, si: (0, 0)),               # b_shift
            ],
            out_specs=pl.BlockSpec((None, ts, d_out), lambda bi, si: (bi, si, 0)),
        ),
        compiler_params=pltpu.CompilerParams(
            dimension_semantics=("parallel", "parallel"),
            vmem_limit_bytes=vmem_limit,
        ),
        cost_estimate=cost,
    )(te2d, x, residual, *param_ops)
    return out


def time_conditioned_residual_ref(x, residual, time_emb, w, b):
    h = jax.nn.gelu(time_emb.astype(jnp.float32), approximate=False)
    proj = h @ w.astype(jnp.float32) + b.astype(jnp.float32)
    d = x.shape[-1]
    scale, shift = proj[..., :d], proj[..., d:]
    out = x.astype(jnp.float32) * (scale + 1.0) + shift + residual.astype(jnp.float32)
    return out.astype(x.dtype)


if __name__ == "__main__":
    key = jax.random.PRNGKey(0)
    batch, seq, time_emb_dim, dim_out = 2, 8, 64, 128
    kx, kr, kt, kw, kb, kx2, kr2, kt2, kt3 = jax.random.split(key, 9)

    # The PyTorch module zero-inits the linear; use small random weights here
    # to actually exercise the matmul + scale/shift path.
    w = 0.05 * jax.random.normal(kw, (time_emb_dim, 2 * dim_out), dtype=jnp.float32)
    b = 0.05 * jax.random.normal(kb, (2 * dim_out,), dtype=jnp.float32)

    # --- per-token time_emb path ---
    x = jax.random.normal(kx, (batch, seq, dim_out), dtype=jnp.float32)
    residual = jax.random.normal(kr, (batch, seq, dim_out), dtype=jnp.float32)
    time_emb = jax.random.normal(kt, (batch, seq, time_emb_dim), dtype=jnp.float32)

    out = jax.block_until_ready(time_conditioned_residual(x, residual, time_emb, w, b))
    ref = time_conditioned_residual_ref(x, residual, time_emb, w, b)
    assert out.shape == x.shape, (out.shape, x.shape)
    err = float(jnp.max(jnp.abs(out - ref)))
    assert err < 1e-4, err

    # Module's actual init (zero weight/bias): forward must reduce to x + residual.
    out0 = jax.block_until_ready(
        time_conditioned_residual(x, residual, time_emb, jnp.zeros_like(w), jnp.zeros_like(b)))
    err0 = float(jnp.max(jnp.abs(out0 - (x + residual))))
    assert err0 < 1e-5, err0

    # --- per-batch (broadcast) time_emb path, multi-tile grid with a partial tile ---
    seq2 = 40
    x2 = jax.random.normal(kx2, (batch, seq2, dim_out), dtype=jnp.float32)
    r2 = jax.random.normal(kr2, (batch, seq2, dim_out), dtype=jnp.float32)
    te_b = jax.random.normal(kt2, (batch, 1, time_emb_dim), dtype=jnp.float32)

    out_b = jax.block_until_ready(
        time_conditioned_residual(x2, r2, te_b, w, b, tile_rows=16))
    ref_b = time_conditioned_residual_ref(x2, r2, te_b, w, b)
    err_b = float(jnp.max(jnp.abs(out_b - ref_b)))
    assert err_b < 1e-4, err_b

    # --- per-token path with an explicit multi-step grid ---
    te_full = jax.random.normal(kt3, (batch, seq2, time_emb_dim), dtype=jnp.float32)
    out_t = jax.block_until_ready(
        time_conditioned_residual(x2, r2, te_full, w, b, tile_rows=16))
    ref_t = time_conditioned_residual_ref(x2, r2, te_full, w, b)
    err_t = float(jnp.max(jnp.abs(out_t - ref_t)))
    assert err_t < 1e-4, err_t

    print("KERNEL_OK")
</pallas_src>

<mosaic_0001>
module attributes {stable_mosaic.version = 11 : i64} {
  func.func @_tcr_kernel(%arg0: i32, %arg1: memref<16x64xf32, #tpu.memory_space<vmem>>, %arg2: memref<16x128xf32, #tpu.memory_space<vmem>>, %arg3: memref<16x128xf32, #tpu.memory_space<vmem>>, %arg4: memref<64x128xf32, #tpu.memory_space<vmem>>, %arg5: memref<64x128xf32, #tpu.memory_space<vmem>>, %arg6: memref<1x128xf32, #tpu.memory_space<vmem>>, %arg7: memref<1x128xf32, #tpu.memory_space<vmem>>, %arg8: memref<16x128xf32, #tpu.memory_space<vmem>>) attributes {dimension_semantics = [#tpu.dimension_semantics<parallel>], iteration_bounds = array<i64: 1>, scalar_prefetch = 0 : i64, scratch_operands = 0 : i64, tpu.core_type = #tpu.core_type<tc>, window_params = [{transform_indices = @transform_0, window_bounds = array<i64: 16, 64>}, {transform_indices = @transform_1, window_bounds = array<i64: 16, 128>}, {transform_indices = @transform_2, window_bounds = array<i64: 16, 128>}, {pipeline_mode = #tpu.pipeline_mode<synchronous>, transform_indices = @transform_3, window_bounds = array<i64: 64, 128>}, {pipeline_mode = #tpu.pipeline_mode<synchronous>, transform_indices = @transform_4, window_bounds = array<i64: 64, 128>}, {pipeline_mode = #tpu.pipeline_mode<synchronous>, transform_indices = @transform_5, window_bounds = array<i64: 1, 128>}, {pipeline_mode = #tpu.pipeline_mode<synchronous>, transform_indices = @transform_6, window_bounds = array<i64: 1, 128>}, {transform_indices = @transform_7, window_bounds = array<i64: 16, 128>}]} {
    %c0 = arith.constant 0 : index
    %c0_0 = arith.constant 0 : index
    %0 = vector.load %arg1[%c0, %c0_0] : memref<16x64xf32, #tpu.memory_space<vmem>>, vector<16x64xf32>
    %cst = arith.constant 5.000000e-01 : f32
    %1 = vector.broadcast %cst : f32 to vector<16x64xf32>
    %2 = arith.mulf %1, %0 : vector<16x64xf32>
    %cst_1 = arith.constant 0.707106769 : f32
    %3 = vector.broadcast %cst_1 : f32 to vector<16x64xf32>
    %4 = arith.mulf %0, %3 : vector<16x64xf32>
    %5 = math.absf %4 : vector<16x64xf32>
    %cst_2 = arith.constant 0.327591091 : f32
    %6 = vector.broadcast %cst_2 : f32 to vector<16x64xf32>
    %7 = arith.mulf %6, %5 : vector<16x64xf32>
    %cst_3 = arith.constant 1.000000e+00 : f32
    %8 = vector.broadcast %cst_3 : f32 to vector<16x64xf32>
    %9 = arith.addf %8, %7 : vector<16x64xf32>
    %cst_4 = arith.constant 1.000000e+00 : f32
    %10 = vector.broadcast %cst_4 : f32 to vector<16x64xf32>
    %11 = arith.divf %10, %9 : vector<16x64xf32>
    %cst_5 = arith.constant 1.06140542 : f32
    %12 = vector.broadcast %cst_5 : f32 to vector<16x64xf32>
    %13 = arith.mulf %11, %12 : vector<16x64xf32>
    %cst_6 = arith.constant -1.45315206 : f32
    %14 = vector.broadcast %cst_6 : f32 to vector<16x64xf32>
    %15 = arith.addf %14, %13 : vector<16x64xf32>
    %16 = arith.mulf %11, %15 : vector<16x64xf32>
    %cst_7 = arith.constant 1.42141378 : f32
    %17 = vector.broadcast %cst_7 : f32 to vector<16x64xf32>
    %18 = arith.addf %17, %16 : vector<16x64xf32>
    %19 = arith.mulf %11, %18 : vector<16x64xf32>
    %cst_8 = arith.constant -0.284496725 : f32
    %20 = vector.broadcast %cst_8 : f32 to vector<16x64xf32>
    %21 = arith.addf %20, %19 : vector<16x64xf32>
    %22 = arith.mulf %11, %21 : vector<16x64xf32>
    %cst_9 = arith.constant 0.254829586 : f32
    %23 = vector.broadcast %cst_9 : f32 to vector<16x64xf32>
    %24 = arith.addf %23, %22 : vector<16x64xf32>
    %25 = arith.mulf %11, %24 : vector<16x64xf32>
    %cst_10 = arith.constant 0.000000e+00 : f32
    %26 = vector.broadcast %cst_10 : f32 to vector<16x64xf32>
    %27 = arith.subf %26, %5 : vector<16x64xf32>
    %28 = arith.mulf %27, %5 : vector<16x64xf32>
    %29 = math.exp %28 : vector<16x64xf32>
    %30 = arith.mulf %25, %29 : vector<16x64xf32>
    %cst_11 = arith.constant 1.000000e+00 : f32
    %31 = vector.broadcast %cst_11 : f32 to vector<16x64xf32>
    %32 = arith.subf %31, %30 : vector<16x64xf32>
    %cst_12 = arith.constant 0.000000e+00 : f32
    %33 = vector.broadcast %cst_12 : f32 to vector<16x64xf32>
    %34 = arith.cmpf olt, %4, %33 : vector<16x64xf32>
    %cst_13 = arith.constant 0.000000e+00 : f32
    %35 = vector.broadcast %cst_13 : f32 to vector<16x64xf32>
    %36 = arith.subf %35, %32 : vector<16x64xf32>
    %37 = arith.select %34, %36, %32 : vector<16x64xi1>, vector<16x64xf32>
    %cst_14 = arith.constant 1.000000e+00 : f32
    %38 = vector.broadcast %cst_14 : f32 to vector<16x64xf32>
    %39 = arith.addf %38, %37 : vector<16x64xf32>
    %40 = arith.mulf %2, %39 : vector<16x64xf32>
    %c0_15 = arith.constant 0 : index
    %c0_16 = arith.constant 0 : index
    %41 = vector.load %arg4[%c0_15, %c0_16] : memref<64x128xf32, #tpu.memory_space<vmem>>, vector<64x128xf32>
    %cst_17 = arith.constant dense<0.000000e+00> : vector<16x128xf32>
    %42 = tpu.matmul %40, %41, %cst_17 {dimension_numbers = #tpu.dot_dimension_numbers<[1], [0], [0], [1], [0, 0, 1, 1], [], []>} : vector<16x64xf32>, vector<64x128xf32>, vector<16x128xf32> -> vector<16x128xf32>
    %c0_18 = arith.constant 0 : index
    %c0_19 = arith.constant 0 : index
    %43 = vector.load %arg6[%c0_18, %c0_19] : memref<1x128xf32, #tpu.memory_space<vmem>>, vector<1x128xf32>
    %44 = vector.broadcast %43 : vector<1x128xf32> to vector<16x128xf32>
    %45 = arith.addf %42, %44 : vector<16x128xf32>
    %c0_20 = arith.constant 0 : index
    %c0_21 = arith.constant 0 : index
    %46 = vector.load %arg5[%c0_20, %c0_21] : memref<64x128xf32, #tpu.memory_space<vmem>>, vector<64x128xf32>
    %cst_22 = arith.constant dense<0.000000e+00> : vector<16x128xf32>
    %47 = tpu.matmul %40, %46, %cst_22 {dimension_numbers = #tpu.dot_dimension_numbers<[1], [0], [0], [1], [0, 0, 1, 1], [], []>} : vector<16x64xf32>, vector<64x128xf32>, vector<16x128xf32> -> vector<16x128xf32>
    %c0_23 = arith.constant 0 : index
    %c0_24 = arith.constant 0 : index
    %48 = vector.load %arg7[%c0_23, %c0_24] : memref<1x128xf32, #tpu.memory_space<vmem>>, vector<1x128xf32>
    %49 = vector.broadcast %48 : vector<1x128xf32> to vector<16x128xf32>
    %50 = arith.addf %47, %49 : vector<16x128xf32>
    %c0_25 = arith.constant 0 : index
    %c0_26 = arith.constant 0 : index
    %51 = vector.load %arg2[%c0_25, %c0_26] : memref<16x128xf32, #tpu.memory_space<vmem>>, vector<16x128xf32>
    %c0_27 = arith.constant 0 : index
    %c0_28 = arith.constant 0 : index
    %52 = vector.load %arg3[%c0_27, %c0_28] : memref<16x128xf32, #tpu.memory_space<vmem>>, vector<16x128xf32>
    %53 = arith.mulf %51, %45 : vector<16x128xf32>
    %54 = arith.addf %53, %50 : vector<16x128xf32>
    %55 = arith.addf %54, %52 : vector<16x128xf32>
    %c0_29 = arith.constant 0 : index
    %c0_30 = arith.constant 0 : index
    %56 = vector.load %arg8[%c0_29, %c0_30] : memref<16x128xf32, #tpu.memory_space<vmem>>, vector<16x128xf32>
    tpu.vector_store %arg8[%c0_29, %c0_30], %55 {strides = array<i32>} : memref<16x128xf32, #tpu.memory_space<vmem>>, vector<16x128xf32>,
    return
  }
  func.func @transform_0(%arg0: i32) -> (i32, i32) {
    %c0_i32 = arith.constant 0 : i32
    %c0_i32_0 = arith.constant 0 : i32
    return %arg0, %c0_i32 : i32, i32
  }
  func.func @transform_1(%arg0: i32) -> (i32, i32) {
    %c0_i32 = arith.constant 0 : i32
    %c0_i32_0 = arith.constant 0 : i32
    return %arg0, %c0_i32 : i32, i32
  }
  func.func @transform_2(%arg0: i32) -> (i32, i32) {
    %c0_i32 = arith.constant 0 : i32
    %c0_i32_0 = arith.constant 0 : i32
    return %arg0, %c0_i32 : i32, i32
  }
  func.func @transform_3(%arg0: i32) -> (i32, i32) {
    %c0_i32 = arith.constant 0 : i32
    %c0_i32_0 = arith.constant 0 : i32
    %c0_i32_1 = arith.constant 0 : i32
    return %c0_i32, %c0_i32_0 : i32, i32
  }
  func.func @transform_4(%arg0: i32) -> (i32, i32) {
    %c0_i32 = arith.constant 0 : i32
    %c0_i32_0 = arith.constant 0 : i32
    %c0_i32_1 = arith.constant 0 : i32
    return %c0_i32, %c0_i32_0 : i32, i32
  }
  func.func @transform_5(%arg0: i32) -> (i32, i32) {
    %c0_i32 = arith.constant 0 : i32
    %c0_i32_0 = arith.constant 0 : i32
    %c0_i32_1 = arith.constant 0 : i32
    return %c0_i32, %c0_i32_0 : i32, i32
  }
  func.func @transform_6(%arg0: i32) -> (i32, i32) {
    %c0_i32 = arith.constant 0 : i32
    %c0_i32_0 = arith.constant 0 : i32
    %c0_i32_1 = arith.constant 0 : i32
    return %c0_i32, %c0_i32_0 : i32, i32
  }
  func.func @transform_7(%arg0: i32) -> (i32, i32) {
    %c0_i32 = arith.constant 0 : i32
    %c0_i32_0 = arith.constant 0 : i32
    return %arg0, %c0_i32 : i32, i32
  }
}

</mosaic_0001>

<llo_original>
// kernel: tpu_custom_call.1
$region0: #{tpu_custom_call.1}
  #allocation0 [shape = 'u32[]', space=smem, size = 0x4, offset = 0x4, fixed_abs, tag = 'smem constant byte address 0x4 - core index']
  #allocation1 [shape = 'u32[144,128]{1,0:T(1,128)}', space=vmem, size = 0x12000, scoped, tag = 'internal scratch']
  %s0 = inlined_call_operand.hbm [shape: f32[16,64], index: 0, kind: input, shape index: {}]
  %s1 = inlined_call_operand.hbm [shape: f32[16,128], index: 1, kind: input, shape index: {}]
  %s2 = inlined_call_operand.hbm [shape: f32[16,128], index: 2, kind: input, shape index: {}]
  %s3 = inlined_call_operand.hbm [shape: f32[64,128], index: 3, kind: input, shape index: {}]
  %s4 = inlined_call_operand.hbm [shape: f32[64,128], index: 4, kind: input, shape index: {}]
  %s5 = inlined_call_operand.vmem [shape: f32[1,128], index: 5, kind: input, shape index: {}]
  %s6 = inlined_call_operand.vmem [shape: f32[1,128], index: 6, kind: input, shape index: {}]
  %s7 = inlined_call_operand.hbm [shape: f32[16,128], index: 7, kind: output, shape index: {}]
  %s8 = sld [smem:[#allocation0]]
  $region58: #{tpu_custom_call.1} parent=0
    _
  %s10 = ssub.s32 1, %s8
  %s11 = scalar_select 0, %s10, %s8
  $region1: #{tpu_custom_call.1} parent=0
    #allocation2 [shape = 'u8[8192]{0}', space=vmem, size = 0x2000, scoped, tag = 'input window, operand 0, single buffered']
    #allocation3 [shape = 's32[1]{0}', space=sflag, size = 0x4, scoped, tag = 'scoped memory for tpu_custom_call.1']
    #allocation4 [shape = 's32[1]{0}', space=sflag, size = 0x4, scoped, tag = 'scoped memory for tpu_custom_call.1']
    #allocation5 [shape = 'u8[8192]{0}', space=vmem, size = 0x2000, scoped, tag = 'input window, operand 1, single buffered']
    #allocation6 [shape = 's32[1]{0}', space=sflag, size = 0x4, scoped, tag = 'scoped memory for tpu_custom_call.1']
    #allocation7 [shape = 'u8[8192]{0}', space=vmem, size = 0x2000, scoped, tag = 'input window, operand 2, single buffered']
    #allocation8 [shape = 'u8[32768]{0}', space=vmem, size = 0x8000, scoped, tag = 'input window, operand 3, single buffered']
    #allocation9 [shape = 's32[1]{0}', space=sflag, size = 0x4, scoped, tag = 'scoped memory for tpu_custom_call.1']
    #allocation10 [shape = 'u8[32768]{0}', space=vmem, size = 0x8000, scoped, tag = 'input window, operand 4, single buffered']
    #allocation11 [shape = 'u8[8192]{0}', space=vmem, size = 0x2000, scoped, tag = 'output window, operand 0, single buffered']
    %12 = vsyncpa [#allocation3], 0
    %13 = vsyncpa [#allocation6], 0
    %14 = vsyncpa [#allocation9], 0
    %15 = vsyncpa [#allocation4], 0
    // Predicated region
    $region2: #{tpu_custom_call.1} parent=1 // pred_check
      _
    $region3: #{tpu_custom_call.1} parent=1 // pred_check_branch
      %17 = sbr.rel (0) target = $region5
    $region4: #{tpu_custom_call.1} parent=1 // pred_region
      %s19 = ssub.s32 256, 256
      %20 = vsyncadd [#allocation3], %s19
      %s21 = sshll.u32 [#allocation2], 4
      %s22 = int_to_ptr.vmem [resolvable:$true] %s21
      %27 = dma.hbm_to_vmem [thread:$0]  %s0, 256, %s22, [#allocation3], 128, 128, 8
    $region5: #{tpu_custom_call.1} parent=1 // pred_fallthru
      _
    // Predicated region
    $region6: #{tpu_custom_call.1} parent=1 // pred_check
      _
    $region7: #{tpu_custom_call.1} parent=1 // pred_check_branch
      %29 = sbr.rel (0) target = $region9
    $region8: #{tpu_custom_call.1} parent=1 // pred_region
      %s31 = ssub.s32 256, 256
      %32 = vsyncadd [#allocation6], %s31
      %s33 = sshll.u32 [#allocation5], 4
      %s34 = int_to_ptr.vmem [resolvable:$true] %s33
      %39 = dma.hbm_to_vmem [thread:$0]  %s1, 256, %s34, [#allocation6], 128, 128, 8
    $region9: #{tpu_custom_call.1} parent=1 // pred_fallthru
      _
    // Predicated region
    $region10: #{tpu_custom_call.1} parent=1 // pred_check
      _
    $region11: #{tpu_custom_call.1} parent=1 // pred_check_branch
      %41 = sbr.rel (0) target = $region13
    $region12: #{tpu_custom_call.1} parent=1 // pred_region
      %s43 = ssub.s32 256, 256
      %44 = vsyncadd [#allocation6], %s43
      %s45 = sshll.u32 [#allocation7], 4
      %s46 = int_to_ptr.vmem [resolvable:$true] %s45
      %51 = dma.hbm_to_vmem [thread:$0]  %s2, 256, %s46, [#allocation6], 128, 128, 8
    $region13: #{tpu_custom_call.1} parent=1 // pred_fallthru
      _
    // Predicated region
    $region14: #{tpu_custom_call.1} parent=1 // pred_check
      _
    $region15: #{tpu_custom_call.1} parent=1 // pred_check_branch
      %53 = sbr.rel (0) target = $region17
    $region16: #{tpu_custom_call.1} parent=1 // pred_region
      %s55 = ssub.s32 1024, 1024
      %56 = vsyncadd [#allocation9], %s55
      %s57 = sshll.u32 [#allocation8], 4
      %s58 = int_to_ptr.vmem [resolvable:$true] %s57
      %63 = dma.hbm_to_vmem [thread:$0]  %s3, 1024, %s58, [#allocation9], 128, 128, 8
    $region17: #{tpu_custom_call.1} parent=1 // pred_fallthru
      _
    // Predicated region
    $region18: #{tpu_custom_call.1} parent=1 // pred_check
      _
    $region19: #{tpu_custom_call.1} parent=1 // pred_check_branch
      %65 = sbr.rel (0) target = $region21
    $region20: #{tpu_custom_call.1} parent=1 // pred_region
      %s67 = ssub.s32 1024, 1024
      %68 = vsyncadd [#allocation9], %s67
      %s69 = sshll.u32 [#allocation10], 4
      %s70 = int_to_ptr.vmem [resolvable:$true] %s69
      %75 = dma.hbm_to_vmem [thread:$0]  %s4, 1024, %s70, [#allocation9], 128, 128, 8
    $region21: #{tpu_custom_call.1} parent=1 // pred_fallthru
      _
    // Predicated region
    $region22: #{tpu_custom_call.1} parent=1 // pred_check
      _
    $region23: #{tpu_custom_call.1} parent=1 // pred_check_branch
      %77 = sbr.rel (0) target = $region25
    $region24: #{tpu_custom_call.1} parent=1 // pred_region
      _
    $region25: #{tpu_custom_call.1} parent=1 // pred_fallthru
      _
    // Predicated region
    $region26: #{tpu_custom_call.1} parent=1 // pred_check
      _
    $region27: #{tpu_custom_call.1} parent=1 // pred_check_branch
      %79 = sbr.rel (0) target = $region29
    $region28: #{tpu_custom_call.1} parent=1 // pred_region
      _
    $region29: #{tpu_custom_call.1} parent=1 // pred_fallthru
      _
    // Predicated region
    $region30: #{tpu_custom_call.1} parent=1 // pred_check
      _
    $region31: #{tpu_custom_call.1} parent=1 // pred_check_branch
      %81 = sbr.rel (0) target = $region33
    $region32: #{tpu_custom_call.1} parent=1 // pred_region
      %82 = dma.done [#allocation3], 256
    $region33: #{tpu_custom_call.1} parent=1 // pred_fallthru
      _
    // Predicated region
    $region34: #{tpu_custom_call.1} parent=1 // pred_check
      _
    $region35: #{tpu_custom_call.1} parent=1 // pred_check_branch
      %84 = sbr.rel (0) target = $region37
    $region36: #{tpu_custom_call.1} parent=1 // pred_region
      %85 = dma.done [#allocation6], 256
    $region37: #{tpu_custom_call.1} parent=1 // pred_fallthru
      _
    // Predicated region
    $region38: #{tpu_custom_call.1} parent=1 // pred_check
      _
    $region39: #{tpu_custom_call.1} parent=1 // pred_check_branch
      %87 = sbr.rel (0) target = $region41
    $region40: #{tpu_custom_call.1} parent=1 // pred_region
      %88 = dma.done [#allocation6], 256
    $region41: #{tpu_custom_call.1} parent=1 // pred_fallthru
      _
    // Predicated region
    $region42: #{tpu_custom_call.1} parent=1 // pred_check
      _
    $region43: #{tpu_custom_call.1} parent=1 // pred_check_branch
      %90 = sbr.rel (0) target = $region45
    $region44: #{tpu_custom_call.1} parent=1 // pred_region
      %91 = dma.done [#allocation9], 1024
    $region45: #{tpu_custom_call.1} parent=1 // pred_fallthru
      _
    // Predicated region
    $region46: #{tpu_custom_call.1} parent=1 // pred_check
      _
    $region47: #{tpu_custom_call.1} parent=1 // pred_check_branch
      %93 = sbr.rel (0) target = $region49
    $region48: #{tpu_custom_call.1} parent=1 // pred_region
      %94 = dma.done [#allocation9], 1024
    $region49: #{tpu_custom_call.1} parent=1 // pred_fallthru
      _
    %v95 = vld [vmem:[#allocation2] sm:$0xff]
    %v96 = vld [vmem:[#allocation2 + $0x8] sm:$0xff]
    %v97 = vmul.f32 %v95, 0.5
    %v98 = vmul.f32 %v96, 0.5
    %v99 = vmul.f32 %v95, 0.70710677
    %v100 = vmul.f32 %v96, 0.70710677
    %v101 = vand.u32 2147483647, %v99
    %v102 = vand.u32 2147483647, %v100
    %v103 = vmul.f32 %v101, 0.3275911
    %v104 = vmul.f32 %v102, 0.3275911
    %v105 = vadd.f32 %v103, 1.0
    %v106 = vadd.f32 %v104, 1.0
    %v107 = vrcp.pop %v105
    %v108 = vmul.f32 1.0, %v107
    %v109 = vrcp.pop %v106
    %v110 = vmul.f32 1.0, %v109
    %v111 = vmul.f32 %v108, 1.0614054
    %v112 = vmul.f32 %v110, 1.0614054
    %v113 = vadd.f32 %v111, -1.4531521
    %v114 = vadd.f32 %v112, -1.4531521
    %v115 = vmul.f32 %v108, %v113
    %v116 = vmul.f32 %v110, %v114
    %v117 = vadd.f32 %v115, 1.4214138
    %v118 = vadd.f32 %v116, 1.4214138
    %v119 = vmul.f32 %v108, %v117
    %v120 = vmul.f32 %v110, %v118
    %v121 = vadd.f32 %v119, -0.28449672
    %v122 = vadd.f32 %v120, -0.28449672
    %v123 = vmul.f32 %v108, %v121
    %v124 = vmul.f32 %v110, %v122
    %v125 = vadd.f32 %v123, 0.2548296
    %v126 = vadd.f32 %v124, 0.2548296
    %v127 = vmul.f32 %v108, %v125
    %v128 = vmul.f32 %v110, %v126
    %v129 = vsub.f32 0.0, %v101
    %v130 = vsub.f32 0.0, %v102
    %v131 = vmul.f32 %v129, %v101
    %v132 = vmul.f32 %v130, %v102
    %v133 = vmul.f32 %v131, 1.442695
    %v134 = vpow.pop %v133
    %v135 = vmul.f32 %v132, 1.442695
    %v136 = vpow.pop %v135
    %v137 = vmul.f32 %v127, %v134
    %v138 = vmul.f32 %v128, %v136
    %v139 = vsub.f32 1.0, %v137
    %v140 = vsub.f32 1.0, %v138
    %vm141 = vcmp.lt.f32.partialorder %v99, 0.0
    %vm142 = vcmp.lt.f32.partialorder %v100, 0.0
    %v143 = vsub.f32 0.0, %v139
    %v144 = vsub.f32 0.0, %v140
    %v145 = vsel %vm141, %v143, %v139
    %v146 = vsel %vm142, %v144, %v140
    %v147 = vadd.f32 %v145, 1.0
    %v148 = vadd.f32 %v146, 1.0
    %v149 = vmul.f32 %v97, %v147
    %v150 = vmul.f32 %v98, %v148
    %v151 = vld [vmem:[#allocation8] sm:$0xff]
    %v152 = vld [vmem:[#allocation8 + $0x8] sm:$0xff]
    %v153 = vld [vmem:[#allocation8 + $0x10] sm:$0xff]
    %v154 = vld [vmem:[#allocation8 + $0x18] sm:$0xff]
    %v155 = vld [vmem:[#allocation8 + $0x20] sm:$0xff]
    %v156 = vld [vmem:[#allocation8 + $0x28] sm:$0xff]
    %v157 = vld [vmem:[#allocation8 + $0x30] sm:$0xff]
    %v158 = vld [vmem:[#allocation8 + $0x38] sm:$0xff]
    %v159 = vld [vmem:[%s5] sm:$0x1]
    %v161 = vlaneseq
    %v162 = vshrl.u32 %v161, 7
    %v163 = vsub.s32 0, %v162
    %v164 = vrot.slane %v159, %v163
    %vm166 = vcmask 523264
    %v168 = vsel %vm166, %v149, 0
    %v171 = vsel %vm166, %v150, 0
    %173 = vmatprep.subr.mxu0 0.0
    %174 = vmatpush1.msra.mxu0 %v151
    %175 = vmatprep.subr.mxu0 0.0
    %176 = vmatpush1.msra.mxu0 %v152
    %177 = vmatprep.subr.mxu0 0.0
    %178 = vmatpush1.msra.mxu0 %v153
    %179 = vmatprep.subr.mxu0 0.0
    %180 = vmatpush1.msra.mxu0 %v154
    %181 = vmatprep.subr.mxu0 0.0
    %182 = vmatpush1.msra.mxu0 %v155
    %183 = vmatprep.subr.mxu0 0.0
    %184 = vmatpush1.msra.mxu0 %v156
    %185 = vmatprep.subr.mxu0 0.0
    %186 = vmatpush1.msra.mxu0 %v157
    %187 = vmatprep.subr.mxu0 0.0
    %188 = vmatpush1.msra.mxu0 %v158
    %189 = vmatprep.subr.mxu0 0.0
    %190 = vmatpush1.msra.mxu0 0.0
    %191 = vmatprep.subr.mxu0 0.0
    %192 = vmatpush1.msra.mxu0 0.0
    %193 = vmatprep.subr.mxu0 0.0
    %194 = vmatpush1.msra.mxu0 0.0
    %195 = vmatprep.subr.mxu0 0.0
    %196 = vmatpush1.msra.mxu0 0.0
    %197 = vmatprep.subr.mxu0 0.0
    %198 = vmatpush1.msra.mxu0 0.0
    %199 = vmatprep.subr.mxu0 0.0
    %200 = vmatpush1.msra.mxu0 0.0
    %201 = vmatprep.subr.mxu0 0.0
    %202 = vmatpush1.msra.mxu0 0.0
    %203 = vmatprep.subr.mxu0 0.0
    %204 = vmatpush1.msra.mxu0 0.0
    %205 = vmatprep.subr.mxu0 0.0
    %206 = vmatpush1.msra.mxu0 0.0
    %207 = vmatprep.subr.mxu0 0.0
    %208 = vmatpush1.msra.mxu0 0.0
    %209 = vmatprep.subr.mxu0 0.0
    %210 = vmatpush1.msra.mxu0 0.0
    %211 = vmatprep.subr.mxu0 0.0
    %212 = vmatpush1.msra.mxu0 0.0
    %213 = vmatprep.subr.mxu0 0.0
    %214 = vmatpush1.msra.mxu0 0.0
    %215 = vmatprep.subr.mxu0 0.0
    %216 = vmatpush1.msra.mxu0 0.0
    %217 = vmatprep.subr.mxu0 0.0
    %218 = vmatpush1.msra.mxu0 0.0
    %219 = vmatprep.subr.mxu0 0.0
    %220 = vmatpush1.msra.mxu0 0.0
    %221 = vmatprep.subr.mxu0 0.0
    %222 = vmatpush1.msra.mxu0 0.0
    %223 = vmatprep.subr.mxu0 0.0
    %224 = vmatpush1.msra.mxu0 0.0
    %225 = vmatprep.subr.mxu0 0.0
    %226 = vmatpush1.msra.mxu0 0.0
    %227 = vmatprep.subr.mxu0 0.0
    %228 = vmatpush1.msra.mxu0 0.0
    %229 = vmatprep.subr.mxu0 0.0
    %230 = vmatpush1.msra.mxu0 0.0
    %231 = vmatprep.subr.mxu0 0.0
    %232 = vmatpush1.msra.mxu0 0.0
    %233 = vmatprep.subr.mxu0 0.0
    %234 = vmatpush1.msra.mxu0 0.0
    %235 = vmatprep.subr.mxu0 0.0
    %236 = vmatpush1.msra.mxu0 0.0
    %237 = vmatprep.mubr.f32.mxu0 0.0
    %238 = vmatmul.mubr.f32.gmra.mrb[0].mxu0 %v168
    %v239 = vpop.f32.mrb[0].mxu0
    %v240 = vadd.f32 %v164, %v239
    %v241 = vpop.f32.mrb[0].mxu0
    %242 = vmatprep.mubr.f32.mxu0 0.0
    %243 = vmatmul.mubr.f32.gmra.mrb[0].mxu0 %v171
    %v244 = vpop.f32.mrb[0].mxu0
    %v245 = vadd.f32 %v164, %v244
    %v246 = vpop.f32.mrb[0].mxu0
    %247 = vdwg.mxu0
    %v248 = vld [vmem:[#allocation10] sm:$0xff]
    %v249 = vld [vmem:[#allocation10 + $0x8] sm:$0xff]
    %v250 = vld [vmem:[#allocation10 + $0x10] sm:$0xff]
    %v251 = vld [vmem:[#allocation10 + $0x18] sm:$0xff]
    %v252 = vld [vmem:[#allocation10 + $0x20] sm:$0xff]
    %v253 = vld [vmem:[#allocation10 + $0x28] sm:$0xff]
    %v254 = vld [vmem:[#allocation10 + $0x30] sm:$0xff]
    %v255 = vld [vmem:[#allocation10 + $0x38] sm:$0xff]
    %v256 = vld [vmem:[%s6] sm:$0x1]
    %v258 = vlaneseq
    %v259 = vshrl.u32 %v258, 7
    %v260 = vsub.s32 0, %v259
    %v261 = vrot.slane %v256, %v260
    %263 = vmatprep.subr.mxu0 0.0
    %264 = vmatpush1.msra.mxu0 %v248
    %265 = vmatprep.subr.mxu0 0.0
    %266 = vmatpush1.msra.mxu0 %v249
    %267 = vmatprep.subr.mxu0 0.0
    %268 = vmatpush1.msra.mxu0 %v250
    %269 = vmatprep.subr.mxu0 0.0
    %270 = vmatpush1.msra.mxu0 %v251
    %271 = vmatprep.subr.mxu0 0.0
    %272 = vmatpush1.msra.mxu0 %v252
    %273 = vmatprep.subr.mxu0 0.0
    %274 = vmatpush1.msra.mxu0 %v253
    %275 = vmatprep.subr.mxu0 0.0
    %276 = vmatpush1.msra.mxu0 %v254
    %277 = vmatprep.subr.mxu0 0.0
    %278 = vmatpush1.msra.mxu0 %v255
    %279 = vmatprep.subr.mxu0 0.0
    %280 = vmatpush1.msra.mxu0 0.0
    %281 = vmatprep.subr.mxu0 0.0
    %282 = vmatpush1.msra.mxu0 0.0
    %283 = vmatprep.subr.mxu0 0.0
    %284 = vmatpush1.msra.mxu0 0.0
    %285 = vmatprep.subr.mxu0 0.0
    %286 = vmatpush1.msra.mxu0 0.0
    %287 = vmatprep.subr.mxu0 0.0
    %288 = vmatpush1.msra.mxu0 0.0
    %289 = vmatprep.subr.mxu0 0.0
    %290 = vmatpush1.msra.mxu0 0.0
    %291 = vmatprep.subr.mxu0 0.0
    %292 = vmatpush1.msra.mxu0 0.0
    %293 = vmatprep.subr.mxu0 0.0
    %294 = vmatpush1.msra.mxu0 0.0
    %295 = vmatprep.subr.mxu0 0.0
    %296 = vmatpush1.msra.mxu0 0.0
    %297 = vmatprep.subr.mxu0 0.0
    %298 = vmatpush1.msra.mxu0 0.0
    %299 = vmatprep.subr.mxu0 0.0
    %300 = vmatpush1.msra.mxu0 0.0
    %301 = vmatprep.subr.mxu0 0.0
    %302 = vmatpush1.msra.mxu0 0.0
    %303 = vmatprep.subr.mxu0 0.0
    %304 = vmatpush1.msra.mxu0 0.0
    %305 = vmatprep.subr.mxu0 0.0
    %306 = vmatpush1.msra.mxu0 0.0
    %307 = vmatprep.subr.mxu0 0.0
    %308 = vmatpush1.msra.mxu0 0.0
    %309 = vmatprep.subr.mxu0 0.0
    %310 = vmatpush1.msra.mxu0 0.0
    %311 = vmatprep.subr.mxu0 0.0
    %312 = vmatpush1.msra.mxu0 0.0
    %313 = vmatprep.subr.mxu0 0.0
    %314 = vmatpush1.msra.mxu0 0.0
    %315 = vmatprep.subr.mxu0 0.0
    %316 = vmatpush1.msra.mxu0 0.0
    %317 = vmatprep.subr.mxu0 0.0
    %318 = vmatpush1.msra.mxu0 0.0
    %319 = vmatprep.subr.mxu0 0.0
    %320 = vmatpush1.msra.mxu0 0.0
    %321 = vmatprep.subr.mxu0 0.0
    %322 = vmatpush1.msra.mxu0 0.0
    %323 = vmatprep.subr.mxu0 0.0
    %324 = vmatpush1.msra.mxu0 0.0
    %325 = vmatprep.subr.mxu0 0.0
    %326 = vmatpush1.msra.mxu0 0.0
    %327 = vmatprep.mubr.f32.mxu0 0.0
    %328 = vmatmul.mubr.f32.gmra.mrb[0].mxu0 %v168
    %v329 = vpop.f32.mrb[0].mxu0
    %v330 = vadd.f32 %v261, %v329
    %v331 = vpop.f32.mrb[0].mxu0
    %332 = vmatprep.mubr.f32.mxu0 0.0
    %333 = vmatmul.mubr.f32.gmra.mrb[0].mxu0 %v171
    %v334 = vpop.f32.mrb[0].mxu0
    %v335 = vadd.f32 %v261, %v334
    %v336 = vpop.f32.mrb[0].mxu0
    %337 = vdwg.mxu0
    %v338 = vld [vmem:[#allocation5] sm:$0xff]
    %v339 = vld [vmem:[#allocation5 + $0x8] sm:$0xff]
    %v340 = vld [vmem:[#allocation7] sm:$0xff]
    %v341 = vld [vmem:[#allocation7 + $0x8] sm:$0xff]
    %v342 = vmul.f32 %v338, %v240
    %v343 = vmul.f32 %v339, %v245
    %v344 = vadd.f32 %v342, %v330
    %v345 = vadd.f32 %v343, %v335
    %v346 = vadd.f32 %v344, %v340
    %v347 = vadd.f32 %v345, %v341
    %348 = vst [vmem:[#allocation11] sm:$0xff] %v346
    %349 = vst [vmem:[#allocation11 + $0x8] sm:$0xff] %v347
    // Predicated region
    $region50: #{tpu_custom_call.1} parent=1 // pred_check
      _
    $region51: #{tpu_custom_call.1} parent=1 // pred_check_branch
      %351 = sbr.rel (0) target = $region53
    $region52: #{tpu_custom_call.1} parent=1 // pred_region
      %s353 = ssub.s32 256, 256
      %354 = vsyncadd [#allocation4], %s353
      %s355 = sshll.u32 [#allocation11], 4
      %s356 = int_to_ptr.vmem [resolvable:$true] %s355
      %361 = dma.vmem_to_hbm [thread:$0]  %s356, 256, %s7, [#allocation4], 128, 128, 8
    $region53: #{tpu_custom_call.1} parent=1 // pred_fallthru
      _
    // Predicated region
    $region54: #{tpu_custom_call.1} parent=1 // pred_check
      _
    $region55: #{tpu_custom_call.1} parent=1 // pred_check_branch
      %363 = sbr.rel (0) target = $region57
    $region56: #{tpu_custom_call.1} parent=1 // pred_region
      %364 = dma.done [#allocation4], 256
    $region57: #{tpu_custom_call.1} parent=1 // pred_fallthru
      _
    %365 = vsyncpa [#allocation3], 1
    %366 = vsyncpa [#allocation6], 1
    %367 = vsyncpa [#allocation9], 1
    %368 = vsyncpa [#allocation4], 1

</llo_original>
